<compile_context>
chip_gen: v5e
topology: v5e:2x2
jax: 0.10.0
libtpu: 0.0.40
codegen_flags: <defaults>
</compile_context>

<pallas_src>
import math

import jax
import jax.numpy as jnp
from jax.experimental import pallas as pl
from jax.experimental.pallas import tpu as pltpu

_VMEM_LIMIT = 32 * 1024 * 1024   # safe scoped limit on v5e/v6e (128 MiB) and v7x (64 MiB)
_VMEM_BUDGET = 24 * 1024 * 1024  # headroom used for fusion-fit decisions
_LN_EPS = 1e-6                   # DINOv2 LayerNorm eps


# --------------------------- tiling helpers ----------------------------------

def _pick_tile(dim, target, align):
    """Largest `align`-multiple tile <= target that divides `dim`, else full."""
    if dim <= target:
        return dim
    t = (target // align) * align
    while t >= align:
        if dim % t == 0:
            return t
        t -= align
    return dim  # fall back to full extent (rare; only for awkward sizes)


def _cparams(n_grid_axes):
    return pltpu.CompilerParams(
        dimension_semantics=("parallel",) * n_grid_axes,
        vmem_limit_bytes=_VMEM_LIMIT,
    )


# --------------------------- fused matmul kernel ------------------------------
# out = [res + ls *] act( LN?(x) @ W + b )
#   - LN (over the full feature axis K, f32 stats) optional
#   - activation: None or exact GELU
#   - LayerScale + residual epilogue optional
# MXU inputs bf16, f32 accumulation.

def _make_fused_kernel(has_ln, has_res_ls, activation):
    def kernel(*refs):
        idx = 0
        x_ref = refs[idx]; idx += 1
        w_ref = refs[idx]; idx += 1
        b_ref = refs[idx]; idx += 1
        if has_ln:
            g_ref = refs[idx]; idx += 1
            beta_ref = refs[idx]; idx += 1
        if has_res_ls:
            res_ref = refs[idx]; idx += 1
            ls_ref = refs[idx]; idx += 1
        o_ref = refs[idx]

        x = x_ref[...].astype(jnp.float32)
        if has_ln:
            mu = jnp.mean(x, axis=-1, keepdims=True)
            var = jnp.mean(jnp.square(x - mu), axis=-1, keepdims=True)
            x = (x - mu) * jax.lax.rsqrt(var + _LN_EPS)
            x = x * g_ref[...] + beta_ref[...]

        y = jnp.dot(x.astype(jnp.bfloat16), w_ref[...],
                    preferred_element_type=jnp.float32) + b_ref[...]
        if activation == "gelu":
            y = jax.nn.gelu(y, approximate=False)   # exact erf GELU (torch.nn.GELU)
        if has_res_ls:
            y = res_ref[...].astype(jnp.float32) + y * ls_ref[...]
        o_ref[...] = y.astype(o_ref.dtype)
    return kernel


def fused_matmul(x, w, b, *, ln=None, res_ls=None, activation=None,
                 out_dtype=jnp.float32, tm_target=256, tn_target=512):
    """Tiled, fused (LN?)->matmul->(GELU?)->(LayerScale+residual?) kernel."""
    M, K = x.shape
    Kw, N = w.shape
    assert K == Kw
    tm = _pick_tile(M, tm_target, 8)
    tn = _pick_tile(N, tn_target, 128)
    grid = (M // tm, N // tn)

    in_specs = [
        pl.BlockSpec((tm, K), lambda i, j: (i, 0)),
        pl.BlockSpec((K, tn), lambda i, j: (0, j)),
        pl.BlockSpec((1, tn), lambda i, j: (0, j)),
    ]
    args = [x, w, b.reshape(1, N)]
    if ln is not None:
        g, beta = ln
        in_specs += [pl.BlockSpec((1, K), lambda i, j: (0, 0)),
                     pl.BlockSpec((1, K), lambda i, j: (0, 0))]
        args += [g.reshape(1, K), beta.reshape(1, K)]
    if res_ls is not None:
        res, ls = res_ls
        in_specs += [pl.BlockSpec((tm, tn), lambda i, j: (i, j)),
                     pl.BlockSpec((1, tn), lambda i, j: (0, j))]
        args += [res, ls.reshape(1, N)]

    kernel = _make_fused_kernel(ln is not None, res_ls is not None, activation)
    return pl.pallas_call(
        kernel,
        out_shape=jax.ShapeDtypeStruct((M, N), out_dtype),
        grid=grid,
        in_specs=in_specs,
        out_specs=pl.BlockSpec((tm, tn), lambda i, j: (i, j)),
        compiler_params=_cparams(2),
    )(*args)


# -------------------- attention + proj + LayerScale + residual ----------------
# Grid over batch; each step consumes the (n_pad, 3D) qkv slab of one sample,
# runs all heads (padded keys masked), applies the output projection,
# LayerScale and residual, and writes the (n_pad, D) residual-stream update.
# The head-merged attention output never leaves VMEM.

def _make_attn_proj_kernel(num_heads, head_dim, n_valid, n_pad, scale):
    D = num_heads * head_dim

    def kernel(qkv_ref, pw_ref, pb_ref, res_ref, ls_ref, o_ref):
        qkv = qkv_ref[...]                                     # (n_pad, 3D) bf16
        key_idx = jax.lax.broadcasted_iota(jnp.int32, (n_pad, n_pad), 1)
        kmask = key_idx < n_valid
        outs = []
        # TODO(synk): pack 2 heads per 128 lanes for hd=64 to fully fill vregs.
        for h in range(num_heads):
            q = qkv[:, h * head_dim:(h + 1) * head_dim].astype(jnp.bfloat16)
            k = qkv[:, D + h * head_dim:D + (h + 1) * head_dim].astype(jnp.bfloat16)
            v = qkv[:, 2 * D + h * head_dim:2 * D + (h + 1) * head_dim].astype(jnp.bfloat16)
            # q @ k^T without an explicit transpose (contract on head_dim).
            s = jax.lax.dot_general(q, k, dimension_numbers=(((1,), (1,)), ((), ())),
                                    preferred_element_type=jnp.float32) * scale
            s = jnp.where(kmask, s, -1e30)
            m = jnp.max(s, axis=-1, keepdims=True)
            p = jnp.exp(s - m)
            l = jnp.sum(p, axis=-1, keepdims=True)
            p = p * pl.reciprocal(l, approx=True)
            outs.append(jnp.dot(p.astype(jnp.bfloat16), v,
                                preferred_element_type=jnp.float32))
        o = jnp.concatenate(outs, axis=-1)                     # (n_pad, D) f32
        # fused output projection + LayerScale + residual (all in VMEM)
        y = jnp.dot(o.astype(jnp.bfloat16), pw_ref[...],
                    preferred_element_type=jnp.float32) + pb_ref[...]
        o_ref[...] = (res_ref[...] + y * ls_ref[...]).astype(o_ref.dtype)
    return kernel


def attention_proj(qkv, proj_w, proj_b, ls1, residual,
                   batch, n_pad, n_valid, num_heads, head_dim):
    D = num_heads * head_dim
    kernel = _make_attn_proj_kernel(num_heads, head_dim, n_valid, n_pad,
                                    float(head_dim) ** -0.5)
    return pl.pallas_call(
        kernel,
        out_shape=jax.ShapeDtypeStruct((batch * n_pad, D), jnp.float32),
        grid=(batch,),
        in_specs=[
            pl.BlockSpec((n_pad, 3 * D), lambda b: (b, 0)),
            pl.BlockSpec((D, D), lambda b: (0, 0)),
            pl.BlockSpec((1, D), lambda b: (0, 0)),
            pl.BlockSpec((n_pad, D), lambda b: (b, 0)),
            pl.BlockSpec((1, D), lambda b: (0, 0)),
        ],
        out_specs=pl.BlockSpec((n_pad, D), lambda b: (b, 0)),
        compiler_params=_cparams(1),
    )(qkv, proj_w, proj_b.reshape(1, D), residual, ls1.reshape(1, D))


# ------------------ fused MLP: LN2 + fc1 + GELU + fc2 + LS + residual ---------
# Row-tiled; the (tm, 4D) hidden activation stays in VMEM (no HBM round-trip).

def _mlp_kernel(x_ref, g_ref, beta_ref, w1_ref, b1_ref, w2_ref, b2_ref,
                ls_ref, o_ref):
    x = x_ref[...].astype(jnp.float32)
    mu = jnp.mean(x, axis=-1, keepdims=True)
    var = jnp.mean(jnp.square(x - mu), axis=-1, keepdims=True)
    xn = (x - mu) * jax.lax.rsqrt(var + _LN_EPS)
    xn = xn * g_ref[...] + beta_ref[...]
    h = jnp.dot(xn.astype(jnp.bfloat16), w1_ref[...],
                preferred_element_type=jnp.float32) + b1_ref[...]
    h = jax.nn.gelu(h, approximate=False)
    y = jnp.dot(h.astype(jnp.bfloat16), w2_ref[...],
                preferred_element_type=jnp.float32) + b2_ref[...]
    o_ref[...] = (x + y * ls_ref[...]).astype(o_ref.dtype)


def _mlp_vmem_bytes(tm, D, H):
    """Rough double-buffered VMEM footprint of the fused MLP kernel."""
    b = 0
    b += 2 * tm * D * 4          # x tile (f32)
    b += 2 * D * H * 2           # fc1_w (bf16)
    b += 2 * H * D * 2           # fc2_w (bf16)
    b += 2 * tm * D * 4          # out tile (f32)
    b += tm * H * 4              # hidden activation (f32, single)
    b += 2 * (3 * D + H) * 4     # vectors
    return b


def fused_mlp(x, ln, w1, b1, w2, b2, ls, *, tm_target=256):
    M, D = x.shape
    _, H = w1.shape
    tm = _pick_tile(M, tm_target, 8)
    while _mlp_vmem_bytes(tm, D, H) > _VMEM_BUDGET and tm > 8:
        nt = _pick_tile(M, max(8, tm // 2), 8)
        if nt >= tm:
            break
        tm = nt
    if _mlp_vmem_bytes(tm, D, H) > _VMEM_BUDGET:
        # Weights too large to keep both resident: fall back to two tiled
        # kernels (hidden activation round-trips HBM).
        h = fused_matmul(x, w1, b1, ln=ln, activation="gelu")
        return fused_matmul(h, w2, b2, res_ls=(x, ls))

    g, beta = ln
    return pl.pallas_call(
        _mlp_kernel,
        out_shape=jax.ShapeDtypeStruct((M, D), jnp.float32),
        grid=(M // tm,),
        in_specs=[
            pl.BlockSpec((tm, D), lambda i: (i, 0)),
            pl.BlockSpec((1, D), lambda i: (0, 0)),
            pl.BlockSpec((1, D), lambda i: (0, 0)),
            pl.BlockSpec((D, H), lambda i: (0, 0)),
            pl.BlockSpec((1, H), lambda i: (0, 0)),
            pl.BlockSpec((H, D), lambda i: (0, 0)),
            pl.BlockSpec((1, D), lambda i: (0, 0)),
            pl.BlockSpec((1, D), lambda i: (0, 0)),
        ],
        out_specs=pl.BlockSpec((tm, D), lambda i: (i, 0)),
        compiler_params=_cparams(1),
    )(x, g.reshape(1, D), beta.reshape(1, D), w1, b1.reshape(1, H),
      w2, b2.reshape(1, D), ls.reshape(1, D))


# ----------------------------- parameter setup --------------------------------

class _KeyGen:
    def __init__(self, key):
        self._key = key

    def __call__(self):
        self._key, sub = jax.random.split(self._key)
        return sub


def init_raw_params(key, cfg):
    """PyTorch-module-shaped parameters (f32, separate LoRA A/B factors)."""
    kg = _KeyGen(key)
    D = cfg["embed_dim"]
    C = cfg["in_chans"]
    P = cfg["patch_size"]
    depth = cfg["depth"]
    r = cfg["r"]
    hidden = cfg["mlp_ratio"] * D
    n_tok = (cfg["img_size"] // P) ** 2 + 1

    def nrm(shape, scale=0.02):
        return scale * jax.random.normal(kg(), shape, jnp.float32)

    params = {
        "cfg": cfg,
        "patch_w": nrm((C * P * P, D)),          # conv weight flattened (c,i,j)
        "patch_b": nrm((D,), 0.01),
        "cls_token": nrm((1, 1, D)),
        "pos_embed": nrm((1, n_tok, D)),
        "norm_g": jnp.ones((D,), jnp.float32),
        "norm_b": jnp.zeros((D,), jnp.float32),
        "cls_w": nrm((D, cfg["num_classes"])),
        "cls_b": nrm((cfg["num_classes"],), 0.01),
        "blocks": [],
    }
    lora_bound = 1.0 / math.sqrt(D)  # kaiming_uniform_(a=sqrt(5)) on (r, D)
    for _ in range(depth):
        blk = {
            "ln1_g": jnp.ones((D,), jnp.float32),
            "ln1_b": jnp.zeros((D,), jnp.float32),
            "qkv_w": nrm((D, 3 * D)),            # stored (in, out) for x @ W
            "qkv_b": nrm((3 * D,), 0.01),
            "a_q": jax.random.uniform(kg(), (D, r), jnp.float32, -lora_bound, lora_bound),
            "b_q": jnp.zeros((r, D), jnp.float32),
            "a_v": jax.random.uniform(kg(), (D, r), jnp.float32, -lora_bound, lora_bound),
            "b_v": jnp.zeros((r, D), jnp.float32),
            "proj_w": nrm((D, D)),
            "proj_b": nrm((D,), 0.01),
            "ls1": jnp.full((D,), 1e-5, jnp.float32),   # DINOv2 LayerScale init
            "ln2_g": jnp.ones((D,), jnp.float32),
            "ln2_b": jnp.zeros((D,), jnp.float32),
            "fc1_w": nrm((D, hidden)),
            "fc1_b": nrm((hidden,), 0.01),
            "fc2_w": nrm((hidden, D)),
            "fc2_b": nrm((D,), 0.01),
            "ls2": jnp.full((D,), 1e-5, jnp.float32),
        }
        params["blocks"].append(blk)
    return params


def prepare_params(raw):
    """Fold LoRA delta into W_qkv (forward-only), cast MXU weights to bf16,
    pad the classifier head to a 128-lane output slab."""
    cfg = raw["cfg"]
    D = cfg["embed_dim"]
    alpha = float(cfg["alpha"])
    # NOTE: the reference LoRA wrapper scales the low-rank branch by `alpha`
    # (not alpha/r); we keep that semantic.
    nc = cfg["num_classes"]
    nc_pad = ((nc + 127) // 128) * 128

    p = {
        "cfg": cfg,
        "patch_w": raw["patch_w"].astype(jnp.bfloat16),
        "patch_b": raw["patch_b"],
        "cls_token": raw["cls_token"],
        "pos_embed": raw["pos_embed"],
        "norm_g": raw["norm_g"],
        "norm_b": raw["norm_b"],
        "cls_w_pad": jnp.zeros((D, nc_pad), jnp.float32)
                        .at[:, :nc].set(raw["cls_w"]).astype(jnp.bfloat16),
        "cls_b_pad": jnp.zeros((nc_pad,), jnp.float32).at[:nc].set(raw["cls_b"]),
        "blocks": [],
    }
    for blk in raw["blocks"]:
        qkv_w = blk["qkv_w"]
        # forward-only fold: W_q += alpha*A_q@B_q ; W_v += alpha*A_v@B_v
        qkv_w = qkv_w.at[:, :D].add(alpha * (blk["a_q"] @ blk["b_q"]))
        qkv_w = qkv_w.at[:, 2 * D:].add(alpha * (blk["a_v"] @ blk["b_v"]))
        p["blocks"].append({
            "ln1_g": blk["ln1_g"], "ln1_b": blk["ln1_b"],
            "qkv_w": qkv_w.astype(jnp.bfloat16),
            "qkv_b": blk["qkv_b"],
            "proj_w": blk["proj_w"].astype(jnp.bfloat16),
            "proj_b": blk["proj_b"],
            "ls1": blk["ls1"],
            "ln2_g": blk["ln2_g"], "ln2_b": blk["ln2_b"],
            "fc1_w": blk["fc1_w"].astype(jnp.bfloat16),
            "fc1_b": blk["fc1_b"],
            "fc2_w": blk["fc2_w"].astype(jnp.bfloat16),
            "fc2_b": blk["fc2_b"],
            "ls2": blk["ls2"],
        })
    return p


# ------------------------------- forward pass ---------------------------------

def dinov2_lora_forward(params, x):
    cfg = params["cfg"]
    B, C, H, W = x.shape
    P = cfg["patch_size"]
    D = cfg["embed_dim"]
    nh = cfg["num_heads"]
    hd = D // nh
    gh, gw = H // P, W // P
    Np = gh * gw
    N = Np + 1
    n_pad = ((N + 7) // 8) * 8     # sublane-align the token axis

    # --- patch embed: Conv2d(k=P, stride=P) == unfold patches + matmul ---
    patches = (x.reshape(B, C, gh, P, gw, P)
                .transpose(0, 2, 4, 1, 3, 5)
                .reshape(B * Np, C * P * P))
    tok = fused_matmul(patches, params["patch_w"], params["patch_b"]).reshape(B, Np, D)

    # --- prepend cls token, add positional embedding, pad tokens (JAX glue) ---
    # TODO(synk): interpolate_pos_encoding (bicubic resize) only implemented for
    # the identity case (input resolution == pos-embed resolution).
    cls = jnp.broadcast_to(params["cls_token"], (B, 1, D))
    xt = jnp.concatenate([cls, tok], axis=1) + params["pos_embed"]
    xt = jnp.pad(xt, ((0, 0), (0, n_pad - N), (0, 0)))
    x2 = xt.reshape(B * n_pad, D)                               # residual stream (f32)

    for blk in params["blocks"]:
        # 1) LN1 + fused qkv projection (LoRA already folded into the weight);
        #    qkv stored bf16 (attention casts to bf16 for the MXU anyway).
        qkv = fused_matmul(x2, blk["qkv_w"], blk["qkv_b"],
                           ln=(blk["ln1_g"], blk["ln1_b"]),
                           out_dtype=jnp.bfloat16)
        # 2) attention (all heads, padded keys masked) + output projection
        #    + LayerScale + residual, all in one kernel per batch element.
        x2 = attention_proj(qkv, blk["proj_w"], blk["proj_b"], blk["ls1"],
                            x2, B, n_pad, N, nh, hd)
        # 3) LN2 + fc1 + exact GELU + fc2 + LayerScale + residual, fused; the
        #    hidden activation never leaves VMEM.
        x2 = fused_mlp(x2, (blk["ln2_g"], blk["ln2_b"]),
                       blk["fc1_w"], blk["fc1_b"],
                       blk["fc2_w"], blk["fc2_b"], blk["ls2"])

    # --- final norm + classifier head on cls-token rows only (head=Identity) ---
    cls_feat = x2.reshape(B, n_pad, D)[:, 0]                    # (B, D)
    logits_pad = fused_matmul(cls_feat, params["cls_w_pad"], params["cls_b_pad"],
                              ln=(params["norm_g"], params["norm_b"]))
    return logits_pad[:, :cfg["num_classes"]]


# ----------------------------------- main --------------------------------------

if __name__ == "__main__":
    cfg = dict(
        img_size=16, patch_size=8, in_chans=3, embed_dim=32, depth=2,
        num_heads=4, mlp_ratio=4, num_classes=10, r=3, alpha=1.0,
    )
    key = jax.random.PRNGKey(0)
    k_params, k_x = jax.random.split(key)
    raw_params = init_raw_params(k_params, cfg)
    params = prepare_params(raw_params)

    # PyTorch-style NCHW input
    x = jax.random.normal(k_x, (2, 3, 16, 16), jnp.float32)

    logits = dinov2_lora_forward(params, x)
    jax.block_until_ready(logits)
    assert logits.shape == (2, cfg["num_classes"])
    assert logits.dtype == jnp.float32
    print("KERNEL_OK")
</pallas_src>

<mosaic_0001>
module attributes {stable_mosaic.version = 11 : i64} {
  func.func @kernel(%arg0: i32, %arg1: i32, %arg2: memref<8x192xf32, #tpu.memory_space<vmem>>, %arg3: memref<192x32xbf16, #tpu.memory_space<vmem>>, %arg4: memref<1x32xf32, #tpu.memory_space<vmem>>, %arg5: memref<8x32xf32, #tpu.memory_space<vmem>>) attributes {dimension_semantics = [#tpu.dimension_semantics<parallel>, #tpu.dimension_semantics<parallel>], iteration_bounds = array<i64: 1, 1>, scalar_prefetch = 0 : i64, scratch_operands = 0 : i64, tpu.core_type = #tpu.core_type<tc>, window_params = [{transform_indices = @transform_0, window_bounds = array<i64: 8, 192>}, {transform_indices = @transform_1, window_bounds = array<i64: 192, 32>}, {transform_indices = @transform_2, window_bounds = array<i64: 1, 32>}, {transform_indices = @transform_3, window_bounds = array<i64: 8, 32>}]} {
    %c0 = arith.constant 0 : index
    %c0_0 = arith.constant 0 : index
    %0 = vector.load %arg2[%c0, %c0_0] : memref<8x192xf32, #tpu.memory_space<vmem>>, vector<8x192xf32>
    %1 = arith.truncf %0 : vector<8x192xf32> to vector<8x192xbf16>
    %c0_1 = arith.constant 0 : index
    %c0_2 = arith.constant 0 : index
    %2 = vector.load %arg3[%c0_1, %c0_2] : memref<192x32xbf16, #tpu.memory_space<vmem>>, vector<192x32xbf16>
    %cst = arith.constant dense<0.000000e+00> : vector<8x32xf32>
    %3 = tpu.matmul %1, %2, %cst {dimension_numbers = #tpu.dot_dimension_numbers<[1], [0], [0], [1], [0, 0, 1, 1], [], []>} : vector<8x192xbf16>, vector<192x32xbf16>, vector<8x32xf32> -> vector<8x32xf32>
    %c0_3 = arith.constant 0 : index
    %c0_4 = arith.constant 0 : index
    %4 = vector.load %arg4[%c0_3, %c0_4] : memref<1x32xf32, #tpu.memory_space<vmem>>, vector<1x32xf32>
    %5 = vector.broadcast %4 : vector<1x32xf32> to vector<8x32xf32>
    %6 = arith.addf %3, %5 : vector<8x32xf32>
    %c0_5 = arith.constant 0 : index
    %c0_6 = arith.constant 0 : index
    %7 = vector.load %arg5[%c0_5, %c0_6] : memref<8x32xf32, #tpu.memory_space<vmem>>, vector<8x32xf32>
    tpu.vector_store %arg5[%c0_5, %c0_6], %6 {strides = array<i32>} : memref<8x32xf32, #tpu.memory_space<vmem>>, vector<8x32xf32>,
    return
  }
  func.func @transform_0(%arg0: i32, %arg1: i32) -> (i32, i32) {
    %c0_i32 = arith.constant 0 : i32
    %c0_i32_0 = arith.constant 0 : i32
    return %arg0, %c0_i32 : i32, i32
  }
  func.func @transform_1(%arg0: i32, %arg1: i32) -> (i32, i32) {
    %c0_i32 = arith.constant 0 : i32
    %c0_i32_0 = arith.constant 0 : i32
    return %c0_i32, %arg1 : i32, i32
  }
  func.func @transform_2(%arg0: i32, %arg1: i32) -> (i32, i32) {
    %c0_i32 = arith.constant 0 : i32
    %c0_i32_0 = arith.constant 0 : i32
    return %c0_i32, %arg1 : i32, i32
  }
  func.func @transform_3(%arg0: i32, %arg1: i32) -> (i32, i32) {
    %c0_i32 = arith.constant 0 : i32
    return %arg0, %arg1 : i32, i32
  }
}

</mosaic_0001>

<llo_original>
// kernel: tpu_custom_call.1
$region0: #{tpu_custom_call.1}
  #allocation0 [shape = 'u32[]', space=smem, size = 0x4, offset = 0x4, fixed_abs, tag = 'smem constant byte address 0x4 - core index']
  #allocation1 [shape = 'u32[72,128]{1,0:T(1,128)}', space=vmem, size = 0x9000, scoped, tag = 'internal scratch']
  %s0 = inlined_call_operand.vmem [shape: f32[8,192], index: 0, kind: input, shape index: {}]
  %s1 = inlined_call_operand.vmem [shape: bf16[192,32], index: 1, kind: input, shape index: {}]
  %s2 = inlined_call_operand.vmem [shape: f32[1,32], index: 2, kind: input, shape index: {}]
  %s3 = inlined_call_operand.hbm [shape: f32[8,32], index: 3, kind: output, shape index: {}]
  %s4 = sld [smem:[#allocation0]]
  $region22: #{tpu_custom_call.1} parent=0
    _
  %s6 = ssub.s32 1, %s4
  %s7 = scalar_select 0, %s6, %s4
  $region1: #{tpu_custom_call.1} parent=0
    #allocation2 [shape = 'u8[4096]{0}', space=vmem, size = 0x1000, scoped, tag = 'output window, operand 0, single buffered']
    #allocation3 [shape = 's32[1]{0}', space=sflag, size = 0x4, scoped, tag = 'scoped memory for tpu_custom_call.1']
    %8 = vsyncpa [#allocation3], 0
    // Predicated region
    $region2: #{tpu_custom_call.1} parent=1 // pred_check
      _
    $region3: #{tpu_custom_call.1} parent=1 // pred_check_branch
      %10 = sbr.rel (0) target = $region5
    $region4: #{tpu_custom_call.1} parent=1 // pred_region
      _
    $region5: #{tpu_custom_call.1} parent=1 // pred_fallthru
      _
    // Predicated region
    $region6: #{tpu_custom_call.1} parent=1 // pred_check
      _
    $region7: #{tpu_custom_call.1} parent=1 // pred_check_branch
      %12 = sbr.rel (0) target = $region9
    $region8: #{tpu_custom_call.1} parent=1 // pred_region
      _
    $region9: #{tpu_custom_call.1} parent=1 // pred_fallthru
      _
    // Predicated region
    $region10: #{tpu_custom_call.1} parent=1 // pred_check
      _
    $region11: #{tpu_custom_call.1} parent=1 // pred_check_branch
      %14 = sbr.rel (0) target = $region13
    $region12: #{tpu_custom_call.1} parent=1 // pred_region
      _
    $region13: #{tpu_custom_call.1} parent=1 // pred_fallthru
      _
    %v16 = vld [vmem:[%s0] sm:$0xff]
    %v17 = vld [vmem:[%s0 + $0x8] sm:$0xff]
    %v18 = vpack.c.bf16 %v16, %v16
    %v19 = vpack.c.bf16 %v17, %v17
    %v20 = vld [vmem:[%s1] sm:$0xf]
    %v21 = vld [vmem:[%s1 + $0x4] sm:$0xf]
    %v22 = vld [vmem:[%s1 + $0x8] sm:$0xf]
    %v23 = vld [vmem:[%s1 + $0xc] sm:$0xf]
    %v24 = vld [vmem:[%s1 + $0x10] sm:$0xf]
    %v25 = vld [vmem:[%s1 + $0x14] sm:$0xf]
    %v26 = vld [vmem:[%s1 + $0x18] sm:$0xf]
    %v27 = vld [vmem:[%s1 + $0x1c] sm:$0xf]
    %v28 = vld [vmem:[%s1 + $0x20] sm:$0xf]
    %v29 = vld [vmem:[%s1 + $0x24] sm:$0xf]
    %v30 = vld [vmem:[%s1 + $0x28] sm:$0xf]
    %v31 = vld [vmem:[%s1 + $0x2c] sm:$0xf]
    %v32 = vld [vmem:[%s1 + $0x30] sm:$0xf]
    %v33 = vld [vmem:[%s1 + $0x34] sm:$0xf]
    %v34 = vld [vmem:[%s1 + $0x38] sm:$0xf]
    %v35 = vld [vmem:[%s1 + $0x3c] sm:$0xf]
    %v36 = vld [vmem:[%s1 + $0x40] sm:$0xf]
    %v37 = vld [vmem:[%s1 + $0x44] sm:$0xf]
    %v38 = vld [vmem:[%s1 + $0x48] sm:$0xf]
    %v39 = vld [vmem:[%s1 + $0x4c] sm:$0xf]
    %v40 = vld [vmem:[%s1 + $0x50] sm:$0xf]
    %v41 = vld [vmem:[%s1 + $0x54] sm:$0xf]
    %v42 = vld [vmem:[%s1 + $0x58] sm:$0xf]
    %v43 = vld [vmem:[%s1 + $0x5c] sm:$0xf]
    %v44 = vld [vmem:[%s2] sm:$0x1]
    %v46 = vperm.slane %v44, 0
    %v72 = vunpack.c.l.b16 %v20
    %v73 = vunpack.c.l.b16 %v21
    %v74 = vunpack.c.l.b16 %v22
    %v75 = vunpack.c.l.b16 %v23
    %v76 = vunpack.c.l.b16 %v24
    %v77 = vunpack.c.l.b16 %v25
    %v78 = vunpack.c.l.b16 %v26
    %v79 = vunpack.c.l.b16 %v27
    %v80 = vunpack.c.l.b16 %v28
    %v81 = vunpack.c.l.b16 %v29
    %v82 = vunpack.c.l.b16 %v30
    %v83 = vunpack.c.l.b16 %v31
    %v84 = vunpack.c.l.b16 %v32
    %v85 = vunpack.c.l.b16 %v33
    %v86 = vunpack.c.l.b16 %v34
    %v87 = vunpack.c.l.b16 %v35
    %v88 = vunpack.c.l.b16 %v36
    %v89 = vunpack.c.l.b16 %v37
    %v90 = vunpack.c.l.b16 %v38
    %v91 = vunpack.c.l.b16 %v39
    %v92 = vunpack.c.l.b16 %v40
    %v93 = vunpack.c.l.b16 %v41
    %v94 = vunpack.c.l.b16 %v42
    %v95 = vunpack.c.l.b16 %v43
    %v96 = vpack.c.b16 %v73, %v72
    %v97 = vpack.c.b16 %v75, %v74
    %v98 = vpack.c.b16 %v77, %v76
    %v99 = vpack.c.b16 %v79, %v78
    %v100 = vpack.c.b16 %v81, %v80
    %v101 = vpack.c.b16 %v83, %v82
    %v102 = vpack.c.b16 %v85, %v84
    %v103 = vpack.c.b16 %v87, %v86
    %v104 = vpack.c.b16 %v89, %v88
    %v105 = vpack.c.b16 %v91, %v90
    %v106 = vpack.c.b16 %v93, %v92
    %v107 = vpack.c.b16 %v95, %v94
    %vm120 = vcmask 523264
    %v122 = vsel %vm120, %v19, 0
    %124 = vmatpush.bf16.msra.mxu0 %v103
    %125 = vmatpush.bf16.msra.mxu0 %v102
    %126 = vmatpush.bf16.msra.mxu0 %v101
    %127 = vmatpush.bf16.msra.mxu0 %v100
    %128 = vmatpush.bf16.msra.mxu0 %v99
    %129 = vmatpush.bf16.msra.mxu0 %v98
    %130 = vmatpush.bf16.msra.mxu0 %v97
    %131 = vmatpush.bf16.msra.mxu0 %v96
    %132 = vmatmul.bf16.gmra.mxu0 %v18
    %v133 = vpop.f32.mrf.mxu0
    %v134 = vadd.f32 %v46, %v133
    %v135 = vpop.f32.mrf.mxu0
    %136 = vdwg.mxu0
    %137 = vmatpush.bf16.msra.mxu0 0
    %138 = vmatpush.bf16.msra.mxu0 0
    %139 = vmatpush.bf16.msra.mxu0 0
    %140 = vmatpush.bf16.msra.mxu0 0
    %141 = vmatpush.bf16.msra.mxu0 %v107
    %142 = vmatpush.bf16.msra.mxu0 %v106
    %143 = vmatpush.bf16.msra.mxu0 %v105
    %144 = vmatpush.bf16.msra.mxu0 %v104
    %145 = vmatmul.bf16.gmra.mxu0 %v122
    %v146 = vpop.f32.mrf.mxu0
    %v147 = vadd.f32 %v134, %v146
    %v148 = vpop.f32.mrf.mxu0
    %149 = vdwg.mxu0
    %vm150 = vcmask 261120
    %151 = vst.msk [vmem:[#allocation2] sm:$0xff] %vm150, %v147
    // Predicated region
    $region14: #{tpu_custom_call.1} parent=1 // pred_check
      _
    $region15: #{tpu_custom_call.1} parent=1 // pred_check_branch
      %153 = sbr.rel (0) target = $region17
    $region16: #{tpu_custom_call.1} parent=1 // pred_region
      %155 = vsyncadd [#allocation3], 0
      %s157 = sshll.u32 [#allocation2], 4
      %s158 = int_to_ptr.vmem [resolvable:$true] %s157
      %s159 = sshll.u32 %s3, 4
      %s160 = int_to_ptr.hbm [resolvable:$true] %s159
      %162 = dma.vmem_to_hbm [thread:$0]  %s158, 128, %s160, [#allocation3]
    $region17: #{tpu_custom_call.1} parent=1 // pred_fallthru
      _
    // Predicated region
    $region18: #{tpu_custom_call.1} parent=1 // pred_check
      _
    $region19: #{tpu_custom_call.1} parent=1 // pred_check_branch
      %164 = sbr.rel (0) target = $region21
    $region20: #{tpu_custom_call.1} parent=1 // pred_region
      %166 = dma.done [#allocation3], 128
    $region21: #{tpu_custom_call.1} parent=1 // pred_fallthru
      _
    %167 = vsyncpa [#allocation3], 1

</llo_original>
